<compile_context>
chip_gen: v5e
topology: v5e:2x2
jax: 0.10.0
libtpu: 0.0.40
codegen_flags: <defaults>
</compile_context>

<pallas_src>
import functools

import jax
import jax.numpy as jnp
from jax.experimental import pallas as pl
from jax.experimental.pallas import tpu as pltpu


# ----------------------------------------------------------------------------
# Kernels
# ----------------------------------------------------------------------------
def _ffn_kernel_resident(x_ref, w1t_ref, w2t_ref, scale_ref, o_ref):
    """Both weight matrices fully VMEM-resident (single d_ff chunk)."""
    xb = x_ref[...].astype(jnp.bfloat16)
    h = jnp.dot(xb, w1t_ref[...].astype(jnp.bfloat16),
                preferred_element_type=jnp.float32)
    h = jnp.maximum(h, 0.0)
    h = h * h                                           # squared ReLU (VPU)
    y = jnp.dot(h.astype(jnp.bfloat16), w2t_ref[...].astype(jnp.bfloat16),
                preferred_element_type=jnp.float32)
    o_ref[...] = (y * scale_ref[0]).astype(o_ref.dtype)


def _ffn_kernel_tiled(x_ref, w1t_ref, w2t_ref, scale_ref, o_ref, acc_ref):
    """d_ff tiled on grid axis 1; accumulate into a f32 VMEM scratch."""
    k = pl.program_id(1)

    @pl.when(k == 0)
    def _():
        acc_ref[...] = jnp.zeros_like(acc_ref)

    xb = x_ref[...].astype(jnp.bfloat16)
    h = jnp.dot(xb, w1t_ref[...].astype(jnp.bfloat16),
                preferred_element_type=jnp.float32)
    h = jnp.maximum(h, 0.0)
    h = h * h                                           # squared ReLU (VPU)
    acc_ref[...] += jnp.dot(h.astype(jnp.bfloat16),
                            w2t_ref[...].astype(jnp.bfloat16),
                            preferred_element_type=jnp.float32)

    @pl.when(k == pl.num_programs(1) - 1)
    def _():
        # Folded BitLinear scales (s1^2 * s2), applied once at finalize.
        o_ref[...] = (acc_ref[...] * scale_ref[0]).astype(o_ref.dtype)


# ----------------------------------------------------------------------------
# One-time parameter prep (outside the hot path)
# ----------------------------------------------------------------------------
def _round_up(a, b):
    return (a + b - 1) // b * b


def prepare_bitlinear_weights(w1, w2, eps=1e-5, d_ff_multiple=256):
    """BitNet b1.58 weight-only quantization + layout prep.

    w1: (d_ff, d_model), w2: (d_model, d_ff)  [PyTorch layout]
    Returns:
      w1t_q: (d_model, d_ff_pad) int8 ternary {-1,0,+1}
      w2t_q: (d_ff_pad, d_model) int8 ternary {-1,0,+1}
      out_scale: (1,) f32 = s1^2 * s2
    d_ff is zero-padded to a multiple of `d_ff_multiple` (zero columns/rows are
    exact no-ops through relu^2).
    """
    d_ff, _ = w1.shape
    s1 = jnp.mean(jnp.abs(w1)) + eps
    s2 = jnp.mean(jnp.abs(w2)) + eps
    q1 = jnp.clip(jnp.round(w1 / s1), -1.0, 1.0).astype(jnp.int8)   # (d_ff, d_model)
    q2 = jnp.clip(jnp.round(w2 / s2), -1.0, 1.0).astype(jnp.int8)   # (d_model, d_ff)
    d_ff_pad = _round_up(d_ff, d_ff_multiple)
    if d_ff_pad != d_ff:
        q1 = jnp.pad(q1, ((0, d_ff_pad - d_ff), (0, 0)))
        q2 = jnp.pad(q2, ((0, 0), (0, d_ff_pad - d_ff)))
    out_scale = jnp.reshape(s1 * s1 * s2, (1,)).astype(jnp.float32)
    return q1.T, q2.T, out_scale


# ----------------------------------------------------------------------------
# Tile / VMEM config selection (device aware)
# ----------------------------------------------------------------------------
def _vmem_estimate_bytes(tm, tk, d_model, x_bytes, out_bytes, n_k):
    est = 0
    est += 2 * tm * d_model * x_bytes        # x tile, double-buffered
    est += 2 * 2 * d_model * tk * 1          # int8 W1^T + W2^T chunks, double-buffered
    est += 2 * tm * d_model * out_bytes      # output tile, double-buffered
    if n_k > 1:
        est += tm * d_model * 4              # f32 accumulator scratch
    # In-kernel temporaries: bf16 weight casts, f32 + bf16 h, bf16 x.
    est += 2 * d_model * tk * 2
    est += tm * tk * (4 + 2)
    est += tm * d_model * 2
    return est


def _pick_config(M, d_model, d_ff, x_bytes, out_bytes):
    try:
        vmem_cap = int(pltpu.get_tpu_info().vmem_capacity_bytes)
    except Exception:
        vmem_cap = 64 * 1024 * 1024          # conservative (v7x per-TC)
    vmem_limit = min(vmem_cap - (16 << 20), int(vmem_cap * 0.9))
    vmem_limit = max(vmem_limit, 32 << 20)
    budget = int(vmem_limit * 0.9)

    # Keep >= 2 token tiles so the "parallel" axis can shard across TCs (v7x).
    tm_cap = max(8, _round_up(-(-M // 2), 8))
    tm_opts = sorted({min(t, tm_cap)
                      for t in (1024, 768, 512, 384, 256, 128, 64, 32, 16, 8)},
                     reverse=True)

    # Prefer fully-resident weights (tk == d_ff), then large 256-aligned chunks.
    tk_opts = [d_ff] + sorted({t for t in (2048, 1024, 512, 256, 128)
                               if d_ff % t == 0 and t < d_ff}, reverse=True)

    for tm in tm_opts:               # priority 1: largest token tile (intensity ~ tm)
        for tk in tk_opts:           # priority 2: largest d_ff chunk / resident
            n_k = d_ff // tk
            if _vmem_estimate_bytes(tm, tk, d_model, x_bytes, out_bytes, n_k) <= budget:
                return tm, tk, vmem_limit
    return tm_opts[-1], tk_opts[-1], vmem_limit    # last resort (tiny shapes)


# ----------------------------------------------------------------------------
# Pallas call (jitted) + wrapper
# ----------------------------------------------------------------------------
@functools.partial(jax.jit, static_argnames=("tm", "tk", "vmem_limit"))
def _ffn_pallas_call(x2, w1t_q, w2t_q, out_scale, *, tm, tk, vmem_limit):
    M, d_model = x2.shape
    d_ff = w1t_q.shape[1]
    n_i = -(-M // tm)
    n_k = d_ff // tk
    grid = (n_i, n_k)

    in_specs = [
        pl.BlockSpec((tm, d_model), lambda i, k: (i, 0)),          # x tile (resident over k)
        pl.BlockSpec((d_model, tk), lambda i, k: (0, k)),          # W1^T chunk (int8)
        pl.BlockSpec((tk, d_model), lambda i, k: (k, 0)),          # W2^T chunk (int8)
        pl.BlockSpec(memory_space=pltpu.MemorySpace.SMEM),         # folded scale
    ]
    out_spec = pl.BlockSpec((tm, d_model), lambda i, k: (i, 0))

    if n_k == 1:
        kernel = _ffn_kernel_resident
        scratch_shapes = []
    else:
        kernel = _ffn_kernel_tiled
        scratch_shapes = [pltpu.VMEM((tm, d_model), jnp.float32)]

    flops = 4 * M * d_model * d_ff                                  # two matmuls
    w_bytes = (w1t_q.size + w2t_q.size) * w1t_q.dtype.itemsize
    w_traffic = w_bytes if n_k == 1 else w_bytes * n_i              # re-streamed per token tile
    bytes_accessed = (M * d_model * x2.dtype.itemsize
                      + w_traffic
                      + M * d_model * x2.dtype.itemsize)

    return pl.pallas_call(
        kernel,
        out_shape=jax.ShapeDtypeStruct((M, d_model), x2.dtype),
        grid_spec=pltpu.PrefetchScalarGridSpec(
            num_scalar_prefetch=0,
            grid=grid,
            in_specs=in_specs,
            out_specs=out_spec,
            scratch_shapes=scratch_shapes,
        ),
        compiler_params=pltpu.CompilerParams(
            dimension_semantics=("parallel", "arbitrary"),
            vmem_limit_bytes=int(vmem_limit),
        ),
        cost_estimate=pl.CostEstimate(flops=flops, transcendentals=0,
                                      bytes_accessed=bytes_accessed),
    )(x2, w1t_q, w2t_q, out_scale)


def feed_forward_pallas(x, w1t_q, w2t_q, out_scale, *, tm=None, tk=None):
    """x: (B, S, d_model); w1t_q: (d_model, d_ff_pad) int8; w2t_q: (d_ff_pad, d_model) int8;
    out_scale: (1,) f32.  Returns (B, S, d_model) in x.dtype."""
    B, S, d_model = x.shape
    d_ff = w1t_q.shape[1]
    M = B * S

    auto_tm, auto_tk, vmem_limit = _pick_config(
        M, d_model, d_ff, jnp.dtype(x.dtype).itemsize, jnp.dtype(x.dtype).itemsize)
    tm_eff = auto_tm if tm is None else max(8, _round_up(tm, 8))
    tk_eff = auto_tk if (tk is None or d_ff % tk != 0) else tk

    out = _ffn_pallas_call(x.reshape(M, d_model), w1t_q, w2t_q, out_scale,
                           tm=tm_eff, tk=tk_eff, vmem_limit=vmem_limit)
    return out.reshape(B, S, d_model)


# ----------------------------------------------------------------------------
# Pure-JAX reference matching the PyTorch forward (dropout p=0, full f32)
# ----------------------------------------------------------------------------
def ternary_quantize_dequantize(w, eps=1e-5):
    s = jnp.mean(jnp.abs(w)) + eps
    return jnp.clip(jnp.round(w / s), -1.0, 1.0) * s


def feed_forward_reference(x, w1, w2):
    w1_q = ternary_quantize_dequantize(w1)
    w2_q = ternary_quantize_dequantize(w2)
    h = x @ w1_q.T
    h = jnp.square(jnp.maximum(h, 0.0))
    return h @ w2_q.T


# ----------------------------------------------------------------------------
# Main
# ----------------------------------------------------------------------------
if __name__ == "__main__":
    B, S = 2, 8
    d_model, d_ff = 32, 64

    key = jax.random.PRNGKey(0)
    kx, k1, k2 = jax.random.split(key, 3)

    x = jax.random.normal(kx, (B, S, d_model), dtype=jnp.float32)

    # Deterministic parameter init (nn.Linear-style uniform, bias=False).
    bound1 = 1.0 / jnp.sqrt(d_model)
    bound2 = 1.0 / jnp.sqrt(d_ff)
    w1 = jax.random.uniform(k1, (d_ff, d_model), minval=-bound1, maxval=bound1,
                            dtype=jnp.float32)
    w2 = jax.random.uniform(k2, (d_model, d_ff), minval=-bound2, maxval=bound2,
                            dtype=jnp.float32)

    # One-time parameter prep (ternary int8 + transpose + d_ff padding).
    w1t_q, w2t_q, out_scale = prepare_bitlinear_weights(w1, w2)

    out = feed_forward_pallas(x, w1t_q, w2t_q, out_scale)
    out = jax.block_until_ready(out)

    ref = feed_forward_reference(x, w1, w2)
    assert out.shape == (B, S, d_model)
    # bf16 matmul operands -> looser tolerance than the pure-f32 reference.
    assert jnp.allclose(out, ref, atol=5e-3, rtol=5e-2), "mismatch vs reference"

    print("KERNEL_OK")
</pallas_src>

<mosaic_0001>
module attributes {stable_mosaic.version = 11 : i64} {
  func.func @_ffn_kernel_resident(%arg0: i32, %arg1: i32, %arg2: memref<8x32xf32, #tpu.memory_space<vmem>>, %arg3: memref<32x256xi8, #tpu.memory_space<vmem>>, %arg4: memref<256x32xi8, #tpu.memory_space<vmem>>, %arg5: memref<1xf32, #tpu.memory_space<smem>>, %arg6: memref<8x32xf32, #tpu.memory_space<vmem>>) attributes {dimension_semantics = [#tpu.dimension_semantics<parallel>, #tpu.dimension_semantics<arbitrary>], iteration_bounds = array<i64: 2, 1>, scalar_prefetch = 0 : i64, scratch_operands = 0 : i64, tpu.core_type = #tpu.core_type<tc>, window_params = [{transform_indices = @transform_0, window_bounds = array<i64: 8, 32>}, {transform_indices = @transform_1, window_bounds = array<i64: 32, 256>}, {transform_indices = @transform_2, window_bounds = array<i64: 256, 32>}, {transform_indices = @transform_3, window_bounds = array<i64: 1>}, {transform_indices = @transform_4, window_bounds = array<i64: 8, 32>}]} {
    %c0 = arith.constant 0 : index
    %c0_0 = arith.constant 0 : index
    %0 = vector.load %arg2[%c0, %c0_0] : memref<8x32xf32, #tpu.memory_space<vmem>>, vector<8x32xf32>
    %1 = arith.truncf %0 : vector<8x32xf32> to vector<8x32xbf16>
    %c0_1 = arith.constant 0 : index
    %c0_2 = arith.constant 0 : index
    %2 = vector.load %arg3[%c0_1, %c0_2] : memref<32x256xi8, #tpu.memory_space<vmem>>, vector<32x256xi8>
    %3 = arith.sitofp %2 : vector<32x256xi8> to vector<32x256xbf16>
    %cst = arith.constant dense<0.000000e+00> : vector<8x256xf32>
    %4 = tpu.matmul %1, %3, %cst {dimension_numbers = #tpu.dot_dimension_numbers<[1], [0], [0], [1], [0, 0, 1, 1], [], []>} : vector<8x32xbf16>, vector<32x256xbf16>, vector<8x256xf32> -> vector<8x256xf32>
    %cst_3 = arith.constant 0.000000e+00 : f32
    %5 = vector.broadcast %cst_3 : f32 to vector<8x256xf32>
    %6 = arith.maximumf %4, %5 : vector<8x256xf32>
    %7 = arith.mulf %6, %6 : vector<8x256xf32>
    %8 = arith.truncf %7 : vector<8x256xf32> to vector<8x256xbf16>
    %c0_4 = arith.constant 0 : index
    %c0_5 = arith.constant 0 : index
    %9 = vector.load %arg4[%c0_4, %c0_5] : memref<256x32xi8, #tpu.memory_space<vmem>>, vector<256x32xi8>
    %10 = arith.sitofp %9 : vector<256x32xi8> to vector<256x32xbf16>
    %cst_6 = arith.constant dense<0.000000e+00> : vector<8x32xf32>
    %11 = tpu.matmul %8, %10, %cst_6 {dimension_numbers = #tpu.dot_dimension_numbers<[1], [0], [0], [1], [0, 0, 1, 1], [], []>} : vector<8x256xbf16>, vector<256x32xbf16>, vector<8x32xf32> -> vector<8x32xf32>
    %c0_7 = arith.constant 0 : index
    %12 = memref.load %arg5[%c0_7] : memref<1xf32, #tpu.memory_space<smem>>
    %13 = vector.broadcast %12 : f32 to vector<8x32xf32>
    %14 = arith.mulf %11, %13 : vector<8x32xf32>
    %c0_8 = arith.constant 0 : index
    %c0_9 = arith.constant 0 : index
    %15 = vector.load %arg6[%c0_8, %c0_9] : memref<8x32xf32, #tpu.memory_space<vmem>>, vector<8x32xf32>
    tpu.vector_store %arg6[%c0_8, %c0_9], %14 {strides = array<i32>} : memref<8x32xf32, #tpu.memory_space<vmem>>, vector<8x32xf32>,
    return
  }
  func.func @transform_0(%arg0: i32, %arg1: i32) -> (i32, i32) {
    %c0_i32 = arith.constant 0 : i32
    %c0_i32_0 = arith.constant 0 : i32
    return %arg0, %c0_i32 : i32, i32
  }
  func.func @transform_1(%arg0: i32, %arg1: i32) -> (i32, i32) {
    %c0_i32 = arith.constant 0 : i32
    %c0_i32_0 = arith.constant 0 : i32
    return %c0_i32, %arg1 : i32, i32
  }
  func.func @transform_2(%arg0: i32, %arg1: i32) -> (i32, i32) {
    %c0_i32 = arith.constant 0 : i32
    %c0_i32_0 = arith.constant 0 : i32
    return %arg1, %c0_i32 : i32, i32
  }
  func.func @transform_3(%arg0: i32, %arg1: i32) -> i32 {
    %c0_i32 = arith.constant 0 : i32
    %c0_i32_0 = arith.constant 0 : i32
    return %c0_i32 : i32
  }
  func.func @transform_4(%arg0: i32, %arg1: i32) -> (i32, i32) {
    %c0_i32 = arith.constant 0 : i32
    %c0_i32_0 = arith.constant 0 : i32
    return %arg0, %c0_i32 : i32, i32
  }
}

</mosaic_0001>

<llo_original>
// kernel: _ffn_pallas_call.1
$region0: #{_ffn_pallas_call.1}
  #allocation0 [shape = 'u32[]', space=smem, size = 0x4, offset = 0x4, fixed_abs, tag = 'smem constant byte address 0x4 - core index']
  #allocation1 [shape = 'u32[72,128]{1,0:T(1,128)}', space=vmem, size = 0x9000, scoped, tag = 'internal scratch']
  #allocation2 [shape = 'f32[1]{0:T(128)S(6)}', space=smem, size = 0x200, scoped, tag = 'scoped memory for _ffn_pallas_call.1']
  %s0 = inlined_call_operand.vmem [shape: f32[16,32], index: 0, kind: input, shape index: {}]
  %s1 = inlined_call_operand.vmem [shape: s8[32,256], index: 1, kind: input, shape index: {}]
  %s2 = inlined_call_operand.vmem [shape: s8[256,32], index: 2, kind: input, shape index: {}]
  %s3 = inlined_call_operand.<no memory space> [shape: f32[1], index: 3, kind: input, shape index: {}]
  %s4 = inlined_call_operand.hbm [shape: f32[16,32], index: 4, kind: output, shape index: {}]
  %s5 = sld [smem:[#allocation0]]
  $region49: #{_ffn_pallas_call.1} parent=0
    _
  %s7 = ssub.s32 1, %s5
  %s8 = scalar_select 0, %s7, %s5
  %9 = sst [smem:[#allocation2]] %s3
  $region1: #{_ffn_pallas_call.1} parent=0
    #allocation3 [shape = 'u8[8192]{0}', space=vmem, size = 0x2000, scoped, tag = 'output window, operand 0']
    #allocation4 [shape = 's32[2]{0}', space=sflag, size = 0x8, scoped, tag = 'scoped memory for _ffn_pallas_call.1']
    %10 = vsyncpa [#allocation4], 0
    %s11 = scalar_lea.sflag [#allocation4], 1
    %12 = vsyncpa %s11, 0
    loop: start=0, step=1, limit=4
    $region2: #{_ffn_pallas_call.1} parent=1 // loop_pre_header
      _
    $region3: #{_ffn_pallas_call.1} parent=1 // loop_header
      %s14 = sphi 0, %s18
      %p15 = scmp.ge.s32.totalorder %s14, 4
      %s21 = sphi 0, %s33
      %s22 = sphi 0, %s29
      %s23 = sphi 0, %s21
      %s24 = sphi 0, %s22
      %s25 = sphi 0, %s23
      %s26 = sphi 0, %s24
      %s36 = sphi 0, %s38
      %s39 = sphi 0, %s36
      %s40 = sphi 0, %s39
      %s56 = sphi 0, %s40
      %s62 = sphi 0, %s64
      %s65 = sphi 0, %s62
      %s66 = sphi 0, %s65
      %s82 = sphi 0, %s66
      %s88 = sphi 0, %s90
      %s91 = sphi 0, %s88
      %s92 = sphi 0, %s91
      %s108 = sphi 0, %s92
      %s112 = sphi 0, %s112
      %s114 = sphi 0, %s112
      %s115 = sphi 0, %s114
      %s129 = sphi 0, %s115
      %s135 = sphi 0, %s137
      %s138 = sphi 0, %s135
      %s139 = sphi 0, %s138
      %s155 = sphi 0, %s139
    $region4: #{_ffn_pallas_call.1} parent=1 // loop_header_branch
      %17 = sbr.rel (%p15) target = $region8
    $region5: #{_ffn_pallas_call.1} parent=1 // loop_body
      %s19 = ssub.s32 %s14, 1
      %s20 = ssub.s32 %s14, 2
      %s27 = sadd.s32 1, %s22
      %p28 = scmp.ge.s32.totalorder %s27, 1
      %s29 = scalar_select %p28, 0, %s27
      %s30 = sadd.s32 1, %s21
      %s31 = scalar_select %p28, %s30, %s21
      %p32 = scmp.ge.s32.totalorder %s31, 2
      %s33 = scalar_select %p32, 0, %s31
      %s34 = ssub.s32 %s21, %s33
      %p35 = scmp.eq.s32.totalorder %s34, 0
      %s37 = sadd.s32 %s36, 1
      %s38 = scalar_select %p35, %s36, %s37
      %p41 = pneg %p35
      %p42 = scmp.eq.s32.totalorder %s14, 1
      %p43 = por %p41, %p42
      %p44 = scmp.ne.s32.totalorder %s36, %s39
      %p45 = scmp.eq.s32.totalorder %s14, 0
      %p46 = por %p44, %p45
      %p47 = scmp.ne.s32.totalorder %s36, %s39
      %p48 = scmp.eq.s32.totalorder %s19, 1
      %p49 = por %p47, %p48
      %p50 = scmp.ne.s32.totalorder %s39, %s40
      %p51 = scmp.eq.s32.totalorder %s19, 0
      %p52 = por %p50, %p51
      %p53 = scmp.ne.s32.totalorder %s39, %s40
      %p54 = scmp.eq.s32.totalorder %s20, 1
      %p55 = por %p53, %p54
      %p57 = scmp.ne.s32.totalorder %s40, %s56
      %p58 = scmp.eq.s32.totalorder %s20, 0
      %p59 = por %p57, %p58
      %s60 = ssub.s32 %s22, %s29
      %p61 = scmp.eq.s32.totalorder %s60, 0
      %s63 = sadd.s32 %s62, 1
      %s64 = scalar_select %p61, %s62, %s63
      %p67 = pneg %p61
      %p68 = scmp.eq.s32.totalorder %s14, 1
      %p69 = por %p67, %p68
      %p70 = scmp.ne.s32.totalorder %s62, %s65
      %p71 = scmp.eq.s32.totalorder %s14, 0
      %p72 = por %p70, %p71
      %p73 = scmp.ne.s32.totalorder %s62, %s65
      %p74 = scmp.eq.s32.totalorder %s19, 1
      %p75 = por %p73, %p74
      %p76 = scmp.ne.s32.totalorder %s65, %s66
      %p77 = scmp.eq.s32.totalorder %s19, 0
      %p78 = por %p76, %p77
      %p79 = scmp.ne.s32.totalorder %s65, %s66
      %p80 = scmp.eq.s32.totalorder %s20, 1
      %p81 = por %p79, %p80
      %p83 = scmp.ne.s32.totalorder %s66, %s82
      %p84 = scmp.eq.s32.totalorder %s20, 0
      %p85 = por %p83, %p84
      %s86 = ssub.s32 %s22, %s29
      %p87 = scmp.eq.s32.totalorder %s86, 0
      %s89 = sadd.s32 %s88, 1
      %s90 = scalar_select %p87, %s88, %s89
      %p93 = pneg %p87
      %p94 = scmp.eq.s32.totalorder %s14, 1
      %p95 = por %p93, %p94
      %p96 = scmp.ne.s32.totalorder %s88, %s91
      %p97 = scmp.eq.s32.totalorder %s14, 0
      %p98 = por %p96, %p97
      %p99 = scmp.ne.s32.totalorder %s88, %s91
      %p100 = scmp.eq.s32.totalorder %s19, 1
      %p101 = por %p99, %p100
      %p102 = scmp.ne.s32.totalorder %s91, %s92
      %p103 = scmp.eq.s32.totalorder %s19, 0
      %p104 = por %p102, %p103
      %p105 = scmp.ne.s32.totalorder %s91, %s92
      %p106 = scmp.eq.s32.totalorder %s20, 1
      %p107 = por %p105, %p106
      %p109 = scmp.ne.s32.totalorder %s92, %s108
      %p110 = scmp.eq.s32.totalorder %s20, 0
      %p111 = por %p109, %p110
      %s113 = sadd.s32 %s112, 1
      %p116 = scmp.eq.s32.totalorder %s14, 1
      %p117 = scmp.ne.s32.totalorder %s112, %s114
      %p118 = scmp.eq.s32.totalorder %s14, 0
      %p119 = por %p117, %p118
      %p120 = scmp.ne.s32.totalorder %s112, %s114
      %p121 = scmp.eq.s32.totalorder %s19, 1
      %p122 = por %p120, %p121
      %p123 = scmp.ne.s32.totalorder %s114, %s115
      %p124 = scmp.eq.s32.totalorder %s19, 0
      %p125 = por %p123, %p124
      %p126 = scmp.ne.s32.totalorder %s114, %s115
      %p127 = scmp.eq.s32.totalorder %s20, 1
      %p128 = por %p126, %p127
      %p130 = scmp.ne.s32.totalorder %s115, %s129
      %p131 = scmp.eq.s32.totalorder %s20, 0
      %p132 = por %p130, %p131
      %s133 = ssub.s32 %s21, %s33
      %p134 = scmp.eq.s32.totalorder %s133, 0
      %s136 = sadd.s32 %s135, 1
      %s137 = scalar_select %p134, %s135, %s136
      %p140 = pneg %p134
      %p141 = scmp.eq.s32.totalorder %s14, 1
      %p142 = por %p140, %p141
      %p143 = scmp.ne.s32.totalorder %s135, %s138
      %p144 = scmp.eq.s32.totalorder %s14, 0
      %p145 = por %p143, %p144
      %p146 = scmp.ne.s32.totalorder %s135, %s138
      %p147 = scmp.eq.s32.totalorder %s19, 1
      %p148 = por %p146, %p147
      %p149 = scmp.ne.s32.totalorder %s138, %s139
      %p150 = scmp.eq.s32.totalorder %s19, 0
      %p151 = por %p149, %p150
      %p152 = scmp.ne.s32.totalorder %s138, %s139
      %p153 = scmp.eq.s32.totalorder %s20, 1
      %p154 = por %p152, %p153
      %p156 = scmp.ne.s32.totalorder %s139, %s155
      %p157 = scmp.eq.s32.totalorder %s20, 0
      %p158 = por %p156, %p157
      %p159 = scmp.le.s32.totalorder 1, %s14
      %p160 = scmp.lt.s32.totalorder %s14, 3
      %p161 = pnand %p159, %p160
      %p162 = pneg %p161
      // Predicated region
      $region9: #{_ffn_pallas_call.1} parent=5 // pred_check
        _
      $region10: #{_ffn_pallas_call.1} parent=5 // pred_check_branch
        %164 = sbr.rel (%p161) target = $region12
      $region11: #{_ffn_pallas_call.1} parent=5 // pred_region
        %s165 = ssub.s32 %s14, 1
        // Predicated region
        $region13: #{_ffn_pallas_call.1} parent=11 // pred_check
          %p166 = pneg %p78
        $region14: #{_ffn_pallas_call.1} parent=11 // pred_check_branch
          %168 = sbr.rel (%p166) target = $region16
        $region15: #{_ffn_pallas_call.1} parent=11 // pred_region
          %s169 = smul.u32 2, %s24
          %p170 = scmp.lt.s32.totalorder %s169, 1
          %s171 = scalar_select %p170, %s169, 1
          %s172 = smul.addr %s171, 8
          %s173 = scalar_lea.vmem %s1, %s172
          %s174 = smul.u32 2, %s24
        $region16: #{_ffn_pallas_call.1} parent=11 // pred_fallthru
          _
        // Predicated region
        $region17: #{_ffn_pallas_call.1} parent=11 // pred_check
          %p175 = pneg %p104
        $region18: #{_ffn_pallas_call.1} parent=11 // pred_check_branch
          %177 = sbr.rel (%p175) target = $region20
        $region19: #{_ffn_pallas_call.1} parent=11 // pred_region
          %s178 = smul.u32 8, %s24
          %p179 = scmp.lt.s32.totalorder %s178, 7
          %s180 = scalar_select %p179, %s178, 7
          %s181 = smul.addr %s180, 8
          %s182 = scalar_lea.vmem %s2, %s181
          %s183 = smul.u32 8, %s24
        $region20: #{_ffn_pallas_call.1} parent=11 // pred_fallthru
          _
        // Predicated region
        $region21: #{_ffn_pallas_call.1} parent=11 // pred_check
          %p184 = pneg %p125
        $region22: #{_ffn_pallas_call.1} parent=11 // pred_check_branch
          %186 = sbr.rel (%p184) target = $region24
        $region23: #{_ffn_pallas_call.1} parent=11 // pred_region
          _
        $region24: #{_ffn_pallas_call.1} parent=11 // pred_fallthru
          _
      $region12: #{_ffn_pallas_call.1} parent=5 // pred_fallthru
        _
      %p187 = scmp.lt.s32.totalorder %s14, 2
      // Predicated region
      $region25: #{_ffn_pallas_call.1} parent=5 // pred_check
        %p188 = pneg %p187
      $region26: #{_ffn_pallas_call.1} parent=5 // pred_check_branch
        %190 = sbr.rel (%p188) target = $region28
      $region27: #{_ffn_pallas_call.1} parent=5 // pred_region
        // Predicated region
        $region29: #{_ffn_pallas_call.1} parent=27 // pred_check
          %p191 = pneg %p46
        $region30: #{_ffn_pallas_call.1} parent=27 // pred_check_branch
          %193 = sbr.rel (%p191) target = $region32
        $region31: #{_ffn_pallas_call.1} parent=27 // pred_region
          %p194 = scmp.lt.s32.totalorder %s21, 1
          %s195 = scalar_select %p194, %s21, 1
          %s196 = smul.addr %s195, 8
          %s197 = scalar_lea.vmem %s0, %s196
        $region32: #{_ffn_pallas_call.1} parent=27 // pred_fallthru
          _
      $region28: #{_ffn_pallas_call.1} parent=5 // pred_fallthru
        _
      %p198 = scmp.le.s32.totalorder 1, %s14
      %p199 = scmp.lt.s32.totalorder %s14, 3
      %p200 = pnand %p198, %p199
      %p201 = pneg %p200
      // Predicated region
      $region33: #{_ffn_pallas_call.1} parent=5 // pred_check
        _
      $region34: #{_ffn_pallas_call.1} parent=5 // pred_check_branch
        %203 = sbr.rel (%p200) target = $region36
      $region35: #{_ffn_pallas_call.1} parent=5 // pred_region
        %s204 = ssub.s32 %s14, 1
        %p205 = scmp.lt.s32.totalorder %s23, 1
        %s206 = scalar_select %p205, %s23, 1
        %s207 = smul.addr %s206, 8
        %s208 = scalar_lea.vmem %s0, %s207
        %p209 = pneg %p52
        %p210 = pneg %p49
        %s211 = smul.u32 2, %s24
        %p212 = scmp.lt.s32.totalorder %s211, 1
        %s213 = scalar_select %p212, %s211, 1
        %s214 = smul.addr %s213, 8
        %s215 = scalar_lea.vmem %s1, %s214
        %p216 = pneg %p78
        %p217 = pneg %p75
        %s218 = smul.u32 8, %s24
        %p219 = scmp.lt.s32.totalorder %s218, 7
        %s220 = scalar_select %p219, %s218, 7
        %s221 = smul.addr %s220, 8
        %s222 = scalar_lea.vmem %s2, %s221
        %p223 = pneg %p104
        %p224 = pneg %p101
        %p225 = pneg %p125
        %p226 = pneg %p122
        %p227 = pneg %p151
        %p228 = pneg %p148
        %s229 = sand.u32 %s138, 1
        %s230 = scalar_lea.sflag [#allocation4], %s229
        %s231 = sand.u32 %s138, 1
        %s232 = smul.addr %s231, 8
        %s233 = scalar_lea.vmem [#allocation3], %s232
        %p234 = scmp.lt.s32.totalorder %s23, 1
        %s235 = scalar_select %p234, %s23, 1
        %s236 = smul.addr %s235, 8
        %s237 = scalar_lea.vmem %s0, %s236
        %s238 = smul.u32 2, %s24
        %p239 = scmp.lt.s32.totalorder %s238, 1
        %s240 = scalar_select %p239, %s238, 1
        %s241 = smul.addr %s240, 8
        %s242 = scalar_lea.vmem %s1, %s241
        %s243 = smul.u32 2, %s24
        %s244 = smul.u32 8, %s24
        %p245 = scmp.lt.s32.totalorder %s244, 7
        %s246 = scalar_select %p245, %s244, 7
        %s247 = smul.addr %s246, 8
        %s248 = scalar_lea.vmem %s2, %s247
        %s249 = smul.u32 8, %s24
        %v251 = vld [vmem:[%s237] sm:$0xff]
        %v252 = vpack.c.bf16 %v251, %v251
        %v253 = vld [vmem:[%s242] sm:$0xff]
        %v254 = vld [vmem:[%s242 + $0x8] sm:$0xff]
        %v255 = vunpack.c.0.s8 %v253
        %v256 = vunpack.c.0.s8 %v254
        %v257 = vunpack.c.1.s8 %v253
        %v258 = vunpack.c.1.s8 %v254
        %v259 = vunpack.c.2.s8 %v253
        %v260 = vunpack.c.2.s8 %v254
        %v261 = vunpack.c.3.s8 %v253
        %v262 = vunpack.c.3.s8 %v254
        %v263 = vcvt.s32.f32 %v255
        %v264 = vcvt.s32.f32 %v256
        %v265 = vcvt.s32.f32 %v257
        %v266 = vcvt.s32.f32 %v258
        %v267 = vcvt.s32.f32 %v259
        %v268 = vcvt.s32.f32 %v260
        %v269 = vcvt.s32.f32 %v261
        %v270 = vcvt.s32.f32 %v262
        %v271 = vpack.c.bf16 %v265, %v263
        %v272 = vpack.c.bf16 %v266, %v264
        %v273 = vpack.c.bf16 %v269, %v267
        %v274 = vpack.c.bf16 %v270, %v268
        %vm275 = vcmask 261120
        %v277 = vsel %vm275, %v252, 0
        %279 = vmatpush.bf16.msra.mxu0 0
        %280 = vmatpush.bf16.msra.mxu0 0
        %281 = vmatpush.bf16.msra.mxu0 0
        %282 = vmatpush.bf16.msra.mxu0 0
        %283 = vmatpush.bf16.msra.mxu0 0
        %284 = vmatpush.bf16.msra.mxu0 0
        %285 = vmatpush.bf16.msra.mxu0 %v273
        %286 = vmatpush.bf16.msra.mxu0 %v271
        %287 = vmatmul.bf16.gmra.mxu0 %v277
        %v288 = vpop.f32.mrf.mxu0
        %v289 = vadd.f32 0.0, %v288
        %v290 = vpop.f32.mrf.mxu0
        %291 = vdwg.mxu0
        %292 = vmatpush.bf16.msra.mxu0 0
        %293 = vmatpush.bf16.msra.mxu0 0
        %294 = vmatpush.bf16.msra.mxu0 0
        %295 = vmatpush.bf16.msra.mxu0 0
        %296 = vmatpush.bf16.msra.mxu0 0
        %297 = vmatpush.bf16.msra.mxu0 0
        %298 = vmatpush.bf16.msra.mxu0 %v274
        %299 = vmatpush.bf16.msra.mxu0 %v272
        %300 = vmatmul.bf16.gmra.mxu0 %v277
        %v301 = vpop.f32.mrf.mxu0
        %v302 = vadd.f32 0.0, %v301
        %v303 = vpop.f32.mrf.mxu0
        %304 = vdwg.mxu0
        %v305 = vmax.f32 %v289, 0.0
        %v306 = vmax.f32 %v302, 0.0
        %v307 = vmul.f32 %v305, %v305
        %v308 = vmul.f32 %v306, %v306
        %v309 = vpack.c.bf16 %v307, %v307
        %v310 = vpack.c.bf16 %v308, %v308
        %v311 = vld [vmem:[%s248] sm:$0xff]
        %v312 = vld [vmem:[%s248 + $0x8] sm:$0xff]
        %v313 = vld [vmem:[%s248 + $0x10] sm:$0xff]
        %v314 = vld [vmem:[%s248 + $0x18] sm:$0xff]
        %v315 = vld [vmem:[%s248 + $0x20] sm:$0xff]
        %v316 = vld [vmem:[%s248 + $0x28] sm:$0xff]
        %v317 = vld [vmem:[%s248 + $0x30] sm:$0xff]
        %v318 = vld [vmem:[%s248 + $0x38] sm:$0xff]
        %v319 = vunpack.c.0.s8 %v311
        %v320 = vunpack.c.1.s8 %v311
        %v321 = vunpack.c.2.s8 %v311
        %v322 = vunpack.c.3.s8 %v311
        %v323 = vunpack.c.0.s8 %v312
        %v324 = vunpack.c.1.s8 %v312
        %v325 = vunpack.c.2.s8 %v312
        %v326 = vunpack.c.3.s8 %v312
        %v327 = vunpack.c.0.s8 %v313
        %v328 = vunpack.c.1.s8 %v313
        %v329 = vunpack.c.2.s8 %v313
        %v330 = vunpack.c.3.s8 %v313
        %v331 = vunpack.c.0.s8 %v314
        %v332 = vunpack.c.1.s8 %v314
        %v333 = vunpack.c.2.s8 %v314
        %v334 = vunpack.c.3.s8 %v314
        %v335 = vunpack.c.0.s8 %v315
        %v336 = vunpack.c.1.s8 %v315
        %v337 = vunpack.c.2.s8 %v315
        %v338 = vunpack.c.3.s8 %v315
        %v339 = vunpack.c.0.s8 %v316
        %v340 = vunpack.c.1.s8 %v316
        %v341 = vunpack.c.2.s8 %v316
        %v342 = vunpack.c.3.s8 %v316
        %v343 = vunpack.c.0.s8 %v317
        %v344 = vunpack.c.1.s8 %v317
        %v345 = vunpack.c.2.s8 %v317
        %v346 = vunpack.c.3.s8 %v317
        %v347 = vunpack.c.0.s8 %v318
        %v348 = vunpack.c.1.s8 %v318
        %v349 = vunpack.c.2.s8 %v318
        %v350 = vunpack.c.3.s8 %v318
        %v351 = vcvt.s32.f32 %v319
        %v352 = vcvt.s32.f32 %v320
        %v353 = vcvt.s32.f32 %v321
        %v354 = vcvt.s32.f32 %v322
        %v355 = vcvt.s32.f32 %v323
        %v356 = vcvt.s32.f32 %v324
        %v357 = vcvt.s32.f32 %v325
        %v358 = vcvt.s32.f32 %v326
        %v359 = vcvt.s32.f32 %v327
        %v360 = vcvt.s32.f32 %v328
        %v361 = vcvt.s32.f32 %v329
        %v362 = vcvt.s32.f32 %v330
        %v363 = vcvt.s32.f32 %v331
        %v364 = vcvt.s32.f32 %v332
        %v365 = vcvt.s32.f32 %v333
        %v366 = vcvt.s32.f32 %v334
        %v367 = vcvt.s32.f32 %v335
        %v368 = vcvt.s32.f32 %v336
        %v369 = vcvt.s32.f32 %v337
        %v370 = vcvt.s32.f32 %v338
        %v371 = vcvt.s32.f32 %v339
        %v372 = vcvt.s32.f32 %v340
        %v373 = vcvt.s32.f32 %v341
        %v374 = vcvt.s32.f32 %v342
        %v375 = vcvt.s32.f32 %v343
        %v376 = vcvt.s32.f32 %v344
        %v377 = vcvt.s32.f32 %v345
        %v378 = vcvt.s32.f32 %v346
        %v379 = vcvt.s32.f32 %v347
        %v380 = vcvt.s32.f32 %v348
        %v381 = vcvt.s32.f32 %v349
        %v382 = vcvt.s32.f32 %v350
        %v383 = vpack.c.bf16 %v352, %v351
        %v384 = vpack.c.bf16 %v354, %v353
        %v385 = vpack.c.bf16 %v356, %v355
        %v386 = vpack.c.bf16 %v358, %v357
        %v387 = vpack.c.bf16 %v360, %v359
        %v388 = vpack.c.bf16 %v362, %v361
        %v389 = vpack.c.bf16 %v364, %v363
        %v390 = vpack.c.bf16 %v366, %v365
        %v391 = vpack.c.bf16 %v368, %v367
        %v392 = vpack.c.bf16 %v370, %v369
        %v393 = vpack.c.bf16 %v372, %v371
        %v394 = vpack.c.bf16 %v374, %v373
        %v395 = vpack.c.bf16 %v376, %v375
        %v396 = vpack.c.bf16 %v378, %v377
        %v397 = vpack.c.bf16 %v380, %v379
        %v398 = vpack.c.bf16 %v382, %v381
        %399 = vmatpush.bf16.msra.mxu0 %v390
        %400 = vmatpush.bf16.msra.mxu0 %v389
        %401 = vmatpush.bf16.msra.mxu0 %v388
        %402 = vmatpush.bf16.msra.mxu0 %v387
        %403 = vmatpush.bf16.msra.mxu0 %v386
        %404 = vmatpush.bf16.msra.mxu0 %v385
        %405 = vmatpush.bf16.msra.mxu0 %v384
        %406 = vmatpush.bf16.msra.mxu0 %v383
        %407 = vmatmul.bf16.gmra.mxu0 %v309
        %v408 = vpop.f32.mrf.mxu0
        %v409 = vadd.f32 0.0, %v408
        %v410 = vpop.f32.mrf.mxu0
        %411 = vdwg.mxu0
        %412 = vmatpush.bf16.msra.mxu0 %v398
        %413 = vmatpush.bf16.msra.mxu0 %v397
        %414 = vmatpush.bf16.msra.mxu0 %v396
        %415 = vmatpush.bf16.msra.mxu0 %v395
        %416 = vmatpush.bf16.msra.mxu0 %v394
        %417 = vmatpush.bf16.msra.mxu0 %v393
        %418 = vmatpush.bf16.msra.mxu0 %v392
        %419 = vmatpush.bf16.msra.mxu0 %v391
        %420 = vmatmul.bf16.gmra.mxu0 %v310
        %v421 = vpop.f32.mrf.mxu0
        %v422 = vadd.f32 %v409, %v421
        %v423 = vpop.f32.mrf.mxu0
        %424 = vdwg.mxu0
        %s425 = sld [smem:[#allocation2]]
        %v426 = vstv %s425
        %v427 = vmul.f32 %v422, %v426
        %428 = vst.msk [vmem:[%s233] sm:$0xff] %vm275, %v427
        %s429 = sand.u32 %s138, 1
        %s430 = scalar_lea.sflag [#allocation4], %s429
        %s431 = sand.u32 %s138, 1
        %s432 = smul.addr %s431, 8
        %s433 = scalar_lea.vmem [#allocation3], %s432
        // Predicated region
        $region37: #{_ffn_pallas_call.1} parent=35 // pred_check
          %p434 = pneg %p148
        $region38: #{_ffn_pallas_call.1} parent=35 // pred_check_branch
          %436 = sbr.rel (%p434) target = $region40
        $region39: #{_ffn_pallas_call.1} parent=35 // pred_region
          %438 = vsyncadd %s430, 0
          %s439 = smul.addr %s23, 8
          %s440 = scalar_lea.hbm %s4, %s439
          %s442 = sshll.u32 %s433, 4
          %s443 = int_to_ptr.vmem [resolvable:$true] %s442
          %s444 = sshll.u32 %s440, 4
          %s445 = int_to_ptr.hbm [resolvable:$true] %s444
          %447 = dma.vmem_to_hbm [thread:$0]  %s443, 128, %s445, %s430
        $region40: #{_ffn_pallas_call.1} parent=35 // pred_fallthru
          _
      $region36: #{_ffn_pallas_call.1} parent=5 // pred_fallthru
        _
      %p448 = scmp.le.s32.totalorder 2, %s14
      // Predicated region
      $region41: #{_ffn_pallas_call.1} parent=5 // pred_check
        %p449 = pneg %p448
      $region42: #{_ffn_pallas_call.1} parent=5 // pred_check_branch
        %451 = sbr.rel (%p449) target = $region44
      $region43: #{_ffn_pallas_call.1} parent=5 // pred_region
        %s452 = ssub.s32 %s14, 2
        // Predicated region
        $region45: #{_ffn_pallas_call.1} parent=43 // pred_check
          %p453 = pneg %p154
        $region46: #{_ffn_pallas_call.1} parent=43 // pred_check_branch
          %455 = sbr.rel (%p453) target = $region48
        $region47: #{_ffn_pallas_call.1} parent=43 // pred_region
          %s456 = sand.u32 %s139, 1
          %s457 = scalar_lea.sflag [#allocation4], %s456
          %s458 = sand.u32 %s139, 1
          %s459 = smul.addr %s458, 8
          %s460 = scalar_lea.vmem [#allocation3], %s459
          %462 = dma.done %s457, 128
        $region48: #{_ffn_pallas_call.1} parent=43 // pred_fallthru
          _
      $region44: #{_ffn_pallas_call.1} parent=5 // pred_fallthru
        _
    $region6: #{_ffn_pallas_call.1} parent=1 // loop_footer
      %s18 = sadd.s32 1, %s14
    $region7: #{_ffn_pallas_call.1} parent=1 // loop_footer_branch
      %13 = sbr.rel target = $region3
    $region8: #{_ffn_pallas_call.1} parent=1 // loop_exit
      _
    %463 = vsyncpa [#allocation4], 1
    %s464 = scalar_lea.sflag [#allocation4], 1
    %465 = vsyncpa %s464, 1

</llo_original>
